<compile_context>
chip_gen: v5e
topology: v5e:2x2
jax: 0.10.0
libtpu: 0.0.40
codegen_flags: <defaults>
</compile_context>

<pallas_src>
import functools

import jax
import jax.numpy as jnp
from jax.experimental import pallas as pl
from jax.experimental.pallas import tpu as pltpu


def _apply_activation(h, activation):
    if activation == "relu":
        return jnp.maximum(h, 0.0)
    if activation == "tanh":
        return jnp.tanh(h)
    if activation == "gelu":
        return jax.nn.gelu(h)
    raise ValueError(f"unsupported activation: {activation}")


def _make_critic_kernel(num_hidden, activation):
    """Build a fused MLP kernel for `num_hidden` hidden layers + 1 output unit.

    Ref order: x, (w_l, b_l) for each hidden layer, w_out_row (1, h_last),
    b_out (1, 1), o_ref (1, tile_b).
    """

    def kernel(*refs):
        x_ref = refs[0]
        o_ref = refs[-1]
        p_refs = refs[1:-1]

        h = x_ref[...]
        for l in range(num_hidden):
            w_ref = p_refs[2 * l]
            b_ref = p_refs[2 * l + 1]
            # Linear on the MXU with f32 accumulation, then bias + activation on the VPU.
            h = jnp.dot(h.astype(w_ref.dtype), w_ref[...],
                        preferred_element_type=jnp.float32)
            h = _apply_activation(h + b_ref[...], activation)
            # Dropout: identity in eval mode.

        w_out_ref = p_refs[-2]   # (1, h_last)
        b_out_ref = p_refs[-1]   # (1, 1)
        # Output layer (out_features == 1): contract the (tile_b, h_last)
        # activations against the (1, h_last) weight row so the result is a
        # lane-dense (1, tile_b) row -> full unmasked vector stores instead of
        # 1-of-128 masked stores.
        out = jax.lax.dot_general(
            w_out_ref[...], h.astype(w_out_ref.dtype),
            dimension_numbers=(((1,), (1,)), ((), ())),
            preferred_element_type=jnp.float32,
        )  # (1, tile_b)
        o_ref[...] = (out + b_out_ref[...]).astype(o_ref.dtype)

    return kernel


def critic_forward(x, params, *, activation="relu", tile_b=512,
                   compute_dtype=jnp.bfloat16, vmem_limit_bytes=None):
    """Fused MLP critic forward.  x: (B, obs_dim) float32 -> (B, 1) float32.

    params: list of (W, b) with W shaped (in_features, out_features) and b
    shaped (1, out_features); the last layer must have out_features == 1.
    compute_dtype: dtype of the matmul operands (bf16 recommended on v6e/v7x;
    accumulation is always f32).  Biases are kept in f32.
    """
    assert len(params) >= 1
    assert params[-1][0].shape[1] == 1, "critic output layer must have 1 unit"
    num_hidden = len(params) - 1

    B, obs_dim = x.shape

    # Batch tile: multiple of 128 so full MXU passes are fed, capped so tiny
    # batches are not over-padded.
    tile_b = max(128, (int(tile_b) // 128) * 128)
    tile_b = min(tile_b, pl.cdiv(B, 128) * 128)
    num_tiles = pl.cdiv(B, tile_b)
    b_pad = num_tiles * tile_b

    # Ragged batch: zero-pad instead of asserting divisibility.
    if b_pad != B:
        x = jnp.pad(x, ((0, b_pad - B), (0, 0)))

    # Cast matmul operands at the wrapper boundary; keep biases in f32.
    x_c = x.astype(compute_dtype)

    batch_map = lambda i: (i, 0)
    const_map = lambda i: (0, 0)

    operands = [x_c]
    in_specs = [pl.BlockSpec((tile_b, obs_dim), batch_map)]

    for w, b in params[:-1]:
        d_in, d_out = w.shape
        operands.append(w.astype(compute_dtype))
        in_specs.append(pl.BlockSpec((d_in, d_out), const_map))
        operands.append(b.reshape(1, d_out).astype(jnp.float32))
        in_specs.append(pl.BlockSpec((1, d_out), const_map))

    w_out, b_out = params[-1]
    h_last = w_out.shape[0]
    operands.append(w_out.T.astype(compute_dtype))          # (1, h_last)
    in_specs.append(pl.BlockSpec((1, h_last), const_map))
    operands.append(b_out.reshape(1, 1).astype(jnp.float32))  # (1, 1)
    in_specs.append(pl.BlockSpec((1, 1), const_map))

    cp_kwargs = dict(dimension_semantics=("parallel",))
    if vmem_limit_bytes is not None:
        cp_kwargs["vmem_limit_bytes"] = vmem_limit_bytes

    kernel = _make_critic_kernel(num_hidden, activation)

    out_row = pl.pallas_call(
        kernel,
        out_shape=jax.ShapeDtypeStruct((1, b_pad), jnp.float32),
        grid_spec=pltpu.PrefetchScalarGridSpec(
            num_scalar_prefetch=0,
            grid=(num_tiles,),
            in_specs=in_specs,
            out_specs=pl.BlockSpec((1, tile_b), lambda i: (0, i)),
        ),
        compiler_params=pltpu.CompilerParams(**cp_kwargs),
    )(*operands)

    # Lane-dense (1, b_pad) slab -> (B, 1); the reshape/slice is layout plumbing.
    return out_row.reshape(b_pad, 1)[:B]


def init_critic_params(key, observation_dim, hidden_dims):
    """Deterministic init mimicking PyTorch nn.Linear default (uniform +/- 1/sqrt(fan_in)).
    Weights stored as (in_features, out_features)."""
    layer_dims = [observation_dim, *hidden_dims, 1]
    params = []
    for d_in, d_out in zip(layer_dims[:-1], layer_dims[1:]):
        key, kw, kb = jax.random.split(key, 3)
        bound = 1.0 / jnp.sqrt(d_in)
        w = jax.random.uniform(kw, (d_in, d_out), jnp.float32, -bound, bound)
        b = jax.random.uniform(kb, (1, d_out), jnp.float32, -bound, bound)
        params.append((w, b))
    return params


def critic_reference(x, params, activation="relu"):
    h = x
    for w, b in params[:-1]:
        h = _apply_activation(h @ w + b, activation)
    w_out, b_out = params[-1]
    return h @ w_out + b_out


if __name__ == "__main__":
    key = jax.random.PRNGKey(0)
    observation_dim = 32
    hidden_dims = [32, 32]
    batch = 8

    key, kx = jax.random.split(key)
    x = jax.random.normal(kx, (batch, observation_dim), jnp.float32)
    params = init_critic_params(key, observation_dim, hidden_dims)

    ref = critic_reference(x, params)

    # Exact path (f32 operands) -> tight tolerance vs reference.
    fwd_f32 = jax.jit(functools.partial(critic_forward, compute_dtype=jnp.float32))
    out_f32 = jax.block_until_ready(fwd_f32(x, params))
    assert out_f32.shape == (batch, 1)
    assert jnp.allclose(out_f32, ref, atol=1e-5, rtol=1e-5), "f32 mismatch vs reference"

    # MXU-friendly path (bf16 operands, f32 accumulation) -> looser tolerance.
    fwd_bf16 = jax.jit(functools.partial(critic_forward, compute_dtype=jnp.bfloat16))
    out_bf16 = jax.block_until_ready(fwd_bf16(x, params))
    assert out_bf16.shape == (batch, 1)
    assert jnp.allclose(out_bf16, ref, atol=5e-2, rtol=5e-2), "bf16 mismatch vs reference"

    print("KERNEL_OK")
</pallas_src>

<mosaic_0001>
module attributes {stable_mosaic.version = 11 : i64} {
  func.func @kernel(%arg0: i32, %arg1: memref<128x32xf32, #tpu.memory_space<vmem>>, %arg2: memref<32x32xf32, #tpu.memory_space<vmem>>, %arg3: memref<1x32xf32, #tpu.memory_space<vmem>>, %arg4: memref<32x32xf32, #tpu.memory_space<vmem>>, %arg5: memref<1x32xf32, #tpu.memory_space<vmem>>, %arg6: memref<1x32xf32, #tpu.memory_space<vmem>>, %arg7: memref<1x1xf32, #tpu.memory_space<vmem>>, %arg8: memref<1x128xf32, #tpu.memory_space<vmem>>) attributes {dimension_semantics = [#tpu.dimension_semantics<parallel>], iteration_bounds = array<i64: 1>, scalar_prefetch = 0 : i64, scratch_operands = 0 : i64, tpu.core_type = #tpu.core_type<tc>, window_params = [{transform_indices = @transform_0, window_bounds = array<i64: 128, 32>}, {pipeline_mode = #tpu.pipeline_mode<synchronous>, transform_indices = @transform_1, window_bounds = array<i64: 32, 32>}, {pipeline_mode = #tpu.pipeline_mode<synchronous>, transform_indices = @transform_2, window_bounds = array<i64: 1, 32>}, {pipeline_mode = #tpu.pipeline_mode<synchronous>, transform_indices = @transform_3, window_bounds = array<i64: 32, 32>}, {pipeline_mode = #tpu.pipeline_mode<synchronous>, transform_indices = @transform_4, window_bounds = array<i64: 1, 32>}, {pipeline_mode = #tpu.pipeline_mode<synchronous>, transform_indices = @transform_5, window_bounds = array<i64: 1, 32>}, {pipeline_mode = #tpu.pipeline_mode<synchronous>, transform_indices = @transform_6, window_bounds = array<i64: 1, 1>}, {transform_indices = @transform_7, window_bounds = array<i64: 1, 128>}]} {
    %c0 = arith.constant 0 : index
    %c0_0 = arith.constant 0 : index
    %0 = vector.load %arg1[%c0, %c0_0] : memref<128x32xf32, #tpu.memory_space<vmem>>, vector<128x32xf32>
    %c0_1 = arith.constant 0 : index
    %c0_2 = arith.constant 0 : index
    %1 = vector.load %arg2[%c0_1, %c0_2] : memref<32x32xf32, #tpu.memory_space<vmem>>, vector<32x32xf32>
    %cst = arith.constant dense<0.000000e+00> : vector<128x32xf32>
    %2 = tpu.matmul %0, %1, %cst {dimension_numbers = #tpu.dot_dimension_numbers<[1], [0], [0], [1], [0, 0, 1, 1], [], []>} : vector<128x32xf32>, vector<32x32xf32>, vector<128x32xf32> -> vector<128x32xf32>
    %c0_3 = arith.constant 0 : index
    %c0_4 = arith.constant 0 : index
    %3 = vector.load %arg3[%c0_3, %c0_4] : memref<1x32xf32, #tpu.memory_space<vmem>>, vector<1x32xf32>
    %4 = vector.broadcast %3 : vector<1x32xf32> to vector<128x32xf32>
    %5 = arith.addf %2, %4 : vector<128x32xf32>
    %cst_5 = arith.constant 0.000000e+00 : f32
    %6 = vector.broadcast %cst_5 : f32 to vector<128x32xf32>
    %7 = arith.maximumf %5, %6 : vector<128x32xf32>
    %c0_6 = arith.constant 0 : index
    %c0_7 = arith.constant 0 : index
    %8 = vector.load %arg4[%c0_6, %c0_7] : memref<32x32xf32, #tpu.memory_space<vmem>>, vector<32x32xf32>
    %cst_8 = arith.constant dense<0.000000e+00> : vector<128x32xf32>
    %9 = tpu.matmul %7, %8, %cst_8 {dimension_numbers = #tpu.dot_dimension_numbers<[1], [0], [0], [1], [0, 0, 1, 1], [], []>} : vector<128x32xf32>, vector<32x32xf32>, vector<128x32xf32> -> vector<128x32xf32>
    %c0_9 = arith.constant 0 : index
    %c0_10 = arith.constant 0 : index
    %10 = vector.load %arg5[%c0_9, %c0_10] : memref<1x32xf32, #tpu.memory_space<vmem>>, vector<1x32xf32>
    %11 = vector.broadcast %10 : vector<1x32xf32> to vector<128x32xf32>
    %12 = arith.addf %9, %11 : vector<128x32xf32>
    %cst_11 = arith.constant 0.000000e+00 : f32
    %13 = vector.broadcast %cst_11 : f32 to vector<128x32xf32>
    %14 = arith.maximumf %12, %13 : vector<128x32xf32>
    %c0_12 = arith.constant 0 : index
    %c0_13 = arith.constant 0 : index
    %15 = vector.load %arg6[%c0_12, %c0_13] : memref<1x32xf32, #tpu.memory_space<vmem>>, vector<1x32xf32>
    %cst_14 = arith.constant dense<0.000000e+00> : vector<1x128xf32>
    %16 = tpu.matmul %15, %14, %cst_14 {dimension_numbers = #tpu.dot_dimension_numbers<[1], [1], [0], [0], [0, 0, 1, 0], [], []>} : vector<1x32xf32>, vector<128x32xf32>, vector<1x128xf32> -> vector<1x128xf32>
    %c0_15 = arith.constant 0 : index
    %c0_16 = arith.constant 0 : index
    %17 = vector.load %arg7[%c0_15, %c0_16] : memref<1x1xf32, #tpu.memory_space<vmem>>, vector<1x1xf32>
    %18 = vector.broadcast %17 : vector<1x1xf32> to vector<1x128xf32>
    %19 = arith.addf %16, %18 : vector<1x128xf32>
    %c0_17 = arith.constant 0 : index
    %c0_18 = arith.constant 0 : index
    %20 = vector.load %arg8[%c0_17, %c0_18] : memref<1x128xf32, #tpu.memory_space<vmem>>, vector<1x128xf32>
    tpu.vector_store %arg8[%c0_17, %c0_18], %19 {strides = array<i32>} : memref<1x128xf32, #tpu.memory_space<vmem>>, vector<1x128xf32>,
    return
  }
  func.func @transform_0(%arg0: i32) -> (i32, i32) {
    %c0_i32 = arith.constant 0 : i32
    %c0_i32_0 = arith.constant 0 : i32
    return %arg0, %c0_i32 : i32, i32
  }
  func.func @transform_1(%arg0: i32) -> (i32, i32) {
    %c0_i32 = arith.constant 0 : i32
    %c0_i32_0 = arith.constant 0 : i32
    %c0_i32_1 = arith.constant 0 : i32
    return %c0_i32, %c0_i32_0 : i32, i32
  }
  func.func @transform_2(%arg0: i32) -> (i32, i32) {
    %c0_i32 = arith.constant 0 : i32
    %c0_i32_0 = arith.constant 0 : i32
    %c0_i32_1 = arith.constant 0 : i32
    return %c0_i32, %c0_i32_0 : i32, i32
  }
  func.func @transform_3(%arg0: i32) -> (i32, i32) {
    %c0_i32 = arith.constant 0 : i32
    %c0_i32_0 = arith.constant 0 : i32
    %c0_i32_1 = arith.constant 0 : i32
    return %c0_i32, %c0_i32_0 : i32, i32
  }
  func.func @transform_4(%arg0: i32) -> (i32, i32) {
    %c0_i32 = arith.constant 0 : i32
    %c0_i32_0 = arith.constant 0 : i32
    %c0_i32_1 = arith.constant 0 : i32
    return %c0_i32, %c0_i32_0 : i32, i32
  }
  func.func @transform_5(%arg0: i32) -> (i32, i32) {
    %c0_i32 = arith.constant 0 : i32
    %c0_i32_0 = arith.constant 0 : i32
    %c0_i32_1 = arith.constant 0 : i32
    return %c0_i32, %c0_i32_0 : i32, i32
  }
  func.func @transform_6(%arg0: i32) -> (i32, i32) {
    %c0_i32 = arith.constant 0 : i32
    %c0_i32_0 = arith.constant 0 : i32
    %c0_i32_1 = arith.constant 0 : i32
    return %c0_i32, %c0_i32_0 : i32, i32
  }
  func.func @transform_7(%arg0: i32) -> (i32, i32) {
    %c0_i32 = arith.constant 0 : i32
    %c0_i32_0 = arith.constant 0 : i32
    return %c0_i32, %arg0 : i32, i32
  }
}

</mosaic_0001>

<llo_original>
// kernel: critic_forward.1
$region0: #{critic_forward.1}
  #allocation0 [shape = 'u32[]', space=smem, size = 0x4, offset = 0x4, fixed_abs, tag = 'smem constant byte address 0x4 - core index']
  #allocation1 [shape = 'u32[72,128]{1,0:T(1,128)}', space=vmem, size = 0x9000, scoped, tag = 'internal scratch']
  #allocation2 [shape = 'f32[1,1]{1,0:T(1,128)S(1)}', space=vmem, size = 0x200, scoped, tag = 'scoped memory for critic_forward.1']
  %s0 = inlined_call_operand.vmem [shape: f32[128,32], index: 0, kind: input, shape index: {}]
  %s1 = inlined_call_operand.vmem [shape: f32[32,32], index: 1, kind: input, shape index: {}]
  %s2 = inlined_call_operand.vmem [shape: f32[1,32], index: 2, kind: input, shape index: {}]
  %s3 = inlined_call_operand.vmem [shape: f32[32,32], index: 3, kind: input, shape index: {}]
  %s4 = inlined_call_operand.vmem [shape: f32[1,32], index: 4, kind: input, shape index: {}]
  %s5 = inlined_call_operand.vmem [shape: f32[1,32], index: 5, kind: input, shape index: {}]
  %s6 = inlined_call_operand.<no memory space> [shape: f32[1,1], index: 6, kind: input, shape index: {}]
  %s7 = inlined_call_operand.vmem [shape: f32[1,128], index: 7, kind: output, shape index: {}]
  %s8 = sld [smem:[#allocation0]]
  $region38: #{critic_forward.1} parent=0
    _
  %s10 = ssub.s32 1, %s8
  %s11 = scalar_select 0, %s10, %s8
  %v12 = vstv %s6
  %13 = vst [vmem:[#allocation2] sm:$0x1] %v12
  // Predicated region
  $region2: #{critic_forward.1} parent=0 // pred_check
    _
  $region3: #{critic_forward.1} parent=0 // pred_check_branch
    %15 = sbr.rel (0) target = $region5
  $region4: #{critic_forward.1} parent=0 // pred_region
    _
  $region5: #{critic_forward.1} parent=0 // pred_fallthru
    _
  // Predicated region
  $region6: #{critic_forward.1} parent=0 // pred_check
    _
  $region7: #{critic_forward.1} parent=0 // pred_check_branch
    %17 = sbr.rel (0) target = $region9
  $region8: #{critic_forward.1} parent=0 // pred_region
    _
  $region9: #{critic_forward.1} parent=0 // pred_fallthru
    _
  // Predicated region
  $region10: #{critic_forward.1} parent=0 // pred_check
    _
  $region11: #{critic_forward.1} parent=0 // pred_check_branch
    %19 = sbr.rel (0) target = $region13
  $region12: #{critic_forward.1} parent=0 // pred_region
    _
  $region13: #{critic_forward.1} parent=0 // pred_fallthru
    _
  // Predicated region
  $region14: #{critic_forward.1} parent=0 // pred_check
    _
  $region15: #{critic_forward.1} parent=0 // pred_check_branch
    %21 = sbr.rel (0) target = $region17
  $region16: #{critic_forward.1} parent=0 // pred_region
    _
  $region17: #{critic_forward.1} parent=0 // pred_fallthru
    _
  // Predicated region
  $region18: #{critic_forward.1} parent=0 // pred_check
    _
  $region19: #{critic_forward.1} parent=0 // pred_check_branch
    %23 = sbr.rel (0) target = $region21
  $region20: #{critic_forward.1} parent=0 // pred_region
    _
  $region21: #{critic_forward.1} parent=0 // pred_fallthru
    _
  // Predicated region
  $region22: #{critic_forward.1} parent=0 // pred_check
    _
  $region23: #{critic_forward.1} parent=0 // pred_check_branch
    %25 = sbr.rel (0) target = $region25
  $region24: #{critic_forward.1} parent=0 // pred_region
    _
  $region25: #{critic_forward.1} parent=0 // pred_fallthru
    _
  // Predicated region
  $region26: #{critic_forward.1} parent=0 // pred_check
    _
  $region27: #{critic_forward.1} parent=0 // pred_check_branch
    %27 = sbr.rel (0) target = $region29
  $region28: #{critic_forward.1} parent=0 // pred_region
    _
  $region29: #{critic_forward.1} parent=0 // pred_fallthru
    _
  %v28 = vld [vmem:[%s0] sm:$0xff]
  %v29 = vld [vmem:[%s0 + $0x8] sm:$0xff]
  %v30 = vld [vmem:[%s0 + $0x10] sm:$0xff]
  %v31 = vld [vmem:[%s0 + $0x18] sm:$0xff]
  %v32 = vld [vmem:[%s0 + $0x20] sm:$0xff]
  %v33 = vld [vmem:[%s0 + $0x28] sm:$0xff]
  %v34 = vld [vmem:[%s0 + $0x30] sm:$0xff]
  %v35 = vld [vmem:[%s0 + $0x38] sm:$0xff]
  %v36 = vld [vmem:[%s0 + $0x40] sm:$0xff]
  %v37 = vld [vmem:[%s0 + $0x48] sm:$0xff]
  %v38 = vld [vmem:[%s0 + $0x50] sm:$0xff]
  %v39 = vld [vmem:[%s0 + $0x58] sm:$0xff]
  %v40 = vld [vmem:[%s0 + $0x60] sm:$0xff]
  %v41 = vld [vmem:[%s0 + $0x68] sm:$0xff]
  %v42 = vld [vmem:[%s0 + $0x70] sm:$0xff]
  %v43 = vld [vmem:[%s0 + $0x78] sm:$0xff]
  %v44 = vld [vmem:[%s1] sm:$0xff]
  %v45 = vld [vmem:[%s1 + $0x8] sm:$0xff]
  %v46 = vld [vmem:[%s1 + $0x10] sm:$0xff]
  %v47 = vld [vmem:[%s1 + $0x18] sm:$0xff]
  %v48 = vld [vmem:[%s2] sm:$0x1]
  %v50 = vperm.slane %v48, 0
  %vm52 = vcmask 261120
  %v54 = vsel %vm52, %v28, 0
  %v57 = vsel %vm52, %v29, 0
  %v60 = vsel %vm52, %v30, 0
  %v63 = vsel %vm52, %v31, 0
  %v66 = vsel %vm52, %v32, 0
  %v69 = vsel %vm52, %v33, 0
  %v72 = vsel %vm52, %v34, 0
  %v75 = vsel %vm52, %v35, 0
  %v78 = vsel %vm52, %v36, 0
  %v81 = vsel %vm52, %v37, 0
  %v84 = vsel %vm52, %v38, 0
  %v87 = vsel %vm52, %v39, 0
  %v90 = vsel %vm52, %v40, 0
  %v93 = vsel %vm52, %v41, 0
  %v96 = vsel %vm52, %v42, 0
  %v99 = vsel %vm52, %v43, 0
  %101 = vmatpush.msra.mxu0 0.0
  %102 = vmatpush.msra.mxu0 0.0
  %103 = vmatpush.msra.mxu0 0.0
  %104 = vmatpush.msra.mxu0 0.0
  %105 = vmatpush.msra.mxu0 0.0
  %106 = vmatpush.msra.mxu0 0.0
  %107 = vmatpush.msra.mxu0 0.0
  %108 = vmatpush.msra.mxu0 0.0
  %109 = vmatpush.msra.mxu0 0.0
  %110 = vmatpush.msra.mxu0 0.0
  %111 = vmatpush.msra.mxu0 0.0
  %112 = vmatpush.msra.mxu0 0.0
  %113 = vmatpush.msra.mxu0 %v47
  %114 = vmatpush.msra.mxu0 %v46
  %115 = vmatpush.msra.mxu0 %v45
  %116 = vmatpush.msra.mxu0 %v44
  %117 = vmatmul.f32.gmra.mxu0 %v54
  %v118 = vpop.f32.mrf.mxu0
  %v119 = vadd.f32 %v50, %v118
  %120 = vmatmul.f32.gmra.mxu0 %v57
  %v121 = vpop.f32.mrf.mxu0
  %v122 = vadd.f32 %v50, %v121
  %123 = vmatmul.f32.gmra.mxu0 %v60
  %v124 = vpop.f32.mrf.mxu0
  %v125 = vadd.f32 %v50, %v124
  %126 = vmatmul.f32.gmra.mxu0 %v63
  %v127 = vpop.f32.mrf.mxu0
  %v128 = vadd.f32 %v50, %v127
  %129 = vmatmul.f32.gmra.mxu0 %v66
  %v130 = vpop.f32.mrf.mxu0
  %v131 = vadd.f32 %v50, %v130
  %132 = vmatmul.f32.gmra.mxu0 %v69
  %v133 = vpop.f32.mrf.mxu0
  %v134 = vadd.f32 %v50, %v133
  %135 = vmatmul.f32.gmra.mxu0 %v72
  %v136 = vpop.f32.mrf.mxu0
  %v137 = vadd.f32 %v50, %v136
  %138 = vmatmul.f32.gmra.mxu0 %v75
  %v139 = vpop.f32.mrf.mxu0
  %v140 = vadd.f32 %v50, %v139
  %141 = vmatmul.f32.gmra.mxu0 %v78
  %v142 = vpop.f32.mrf.mxu0
  %v143 = vadd.f32 %v50, %v142
  %144 = vmatmul.f32.gmra.mxu0 %v81
  %v145 = vpop.f32.mrf.mxu0
  %v146 = vadd.f32 %v50, %v145
  %147 = vmatmul.f32.gmra.mxu0 %v84
  %v148 = vpop.f32.mrf.mxu0
  %v149 = vadd.f32 %v50, %v148
  %150 = vmatmul.f32.gmra.mxu0 %v87
  %v151 = vpop.f32.mrf.mxu0
  %v152 = vadd.f32 %v50, %v151
  %153 = vmatmul.f32.gmra.mxu0 %v90
  %v154 = vpop.f32.mrf.mxu0
  %v155 = vadd.f32 %v50, %v154
  %156 = vmatmul.f32.gmra.mxu0 %v93
  %v157 = vpop.f32.mrf.mxu0
  %v158 = vadd.f32 %v50, %v157
  %159 = vmatmul.f32.gmra.mxu0 %v96
  %v160 = vpop.f32.mrf.mxu0
  %v161 = vadd.f32 %v50, %v160
  %162 = vmatmul.f32.gmra.mxu0 %v99
  %v163 = vpop.f32.mrf.mxu0
  %v164 = vadd.f32 %v50, %v163
  %165 = vdwg.mxu0
  %v166 = vmax.f32 %v119, 0.0
  %v167 = vmax.f32 %v122, 0.0
  %v168 = vmax.f32 %v125, 0.0
  %v169 = vmax.f32 %v128, 0.0
  %v170 = vmax.f32 %v131, 0.0
  %v171 = vmax.f32 %v134, 0.0
  %v172 = vmax.f32 %v137, 0.0
  %v173 = vmax.f32 %v140, 0.0
  %v174 = vmax.f32 %v143, 0.0
  %v175 = vmax.f32 %v146, 0.0
  %v176 = vmax.f32 %v149, 0.0
  %v177 = vmax.f32 %v152, 0.0
  %v178 = vmax.f32 %v155, 0.0
  %v179 = vmax.f32 %v158, 0.0
  %v180 = vmax.f32 %v161, 0.0
  %v181 = vmax.f32 %v164, 0.0
  %v182 = vld [vmem:[%s3] sm:$0xff]
  %v183 = vld [vmem:[%s3 + $0x8] sm:$0xff]
  %v184 = vld [vmem:[%s3 + $0x10] sm:$0xff]
  %v185 = vld [vmem:[%s3 + $0x18] sm:$0xff]
  %v186 = vld [vmem:[%s4] sm:$0x1]
  %v188 = vperm.slane %v186, 0
  %v191 = vsel %vm52, %v166, 0
  %v194 = vsel %vm52, %v167, 0
  %v197 = vsel %vm52, %v168, 0
  %v200 = vsel %vm52, %v169, 0
  %v203 = vsel %vm52, %v170, 0
  %v206 = vsel %vm52, %v171, 0
  %v209 = vsel %vm52, %v172, 0
  %v212 = vsel %vm52, %v173, 0
  %v215 = vsel %vm52, %v174, 0
  %v218 = vsel %vm52, %v175, 0
  %v221 = vsel %vm52, %v176, 0
  %v224 = vsel %vm52, %v177, 0
  %v227 = vsel %vm52, %v178, 0
  %v230 = vsel %vm52, %v179, 0
  %v233 = vsel %vm52, %v180, 0
  %v236 = vsel %vm52, %v181, 0
  %238 = vmatpush.msra.mxu0 0.0
  %239 = vmatpush.msra.mxu0 0.0
  %240 = vmatpush.msra.mxu0 0.0
  %241 = vmatpush.msra.mxu0 0.0
  %242 = vmatpush.msra.mxu0 0.0
  %243 = vmatpush.msra.mxu0 0.0
  %244 = vmatpush.msra.mxu0 0.0
  %245 = vmatpush.msra.mxu0 0.0
  %246 = vmatpush.msra.mxu0 0.0
  %247 = vmatpush.msra.mxu0 0.0
  %248 = vmatpush.msra.mxu0 0.0
  %249 = vmatpush.msra.mxu0 0.0
  %250 = vmatpush.msra.mxu0 %v185
  %251 = vmatpush.msra.mxu0 %v184
  %252 = vmatpush.msra.mxu0 %v183
  %253 = vmatpush.msra.mxu0 %v182
  %254 = vmatmul.f32.gmra.mxu0 %v191
  %v255 = vpop.f32.mrf.mxu0
  %v256 = vadd.f32 %v188, %v255
  %257 = vmatmul.f32.gmra.mxu0 %v194
  %v258 = vpop.f32.mrf.mxu0
  %v259 = vadd.f32 %v188, %v258
  %260 = vmatmul.f32.gmra.mxu0 %v197
  %v261 = vpop.f32.mrf.mxu0
  %v262 = vadd.f32 %v188, %v261
  %263 = vmatmul.f32.gmra.mxu0 %v200
  %v264 = vpop.f32.mrf.mxu0
  %v265 = vadd.f32 %v188, %v264
  %266 = vmatmul.f32.gmra.mxu0 %v203
  %v267 = vpop.f32.mrf.mxu0
  %v268 = vadd.f32 %v188, %v267
  %269 = vmatmul.f32.gmra.mxu0 %v206
  %v270 = vpop.f32.mrf.mxu0
  %v271 = vadd.f32 %v188, %v270
  %272 = vmatmul.f32.gmra.mxu0 %v209
  %v273 = vpop.f32.mrf.mxu0
  %v274 = vadd.f32 %v188, %v273
  %275 = vmatmul.f32.gmra.mxu0 %v212
  %v276 = vpop.f32.mrf.mxu0
  %v277 = vadd.f32 %v188, %v276
  %278 = vmatmul.f32.gmra.mxu0 %v215
  %v279 = vpop.f32.mrf.mxu0
  %v280 = vadd.f32 %v188, %v279
  %281 = vmatmul.f32.gmra.mxu0 %v218
  %v282 = vpop.f32.mrf.mxu0
  %v283 = vadd.f32 %v188, %v282
  %284 = vmatmul.f32.gmra.mxu0 %v221
  %v285 = vpop.f32.mrf.mxu0
  %v286 = vadd.f32 %v188, %v285
  %287 = vmatmul.f32.gmra.mxu0 %v224
  %v288 = vpop.f32.mrf.mxu0
  %v289 = vadd.f32 %v188, %v288
  %290 = vmatmul.f32.gmra.mxu0 %v227
  %v291 = vpop.f32.mrf.mxu0
  %v292 = vadd.f32 %v188, %v291
  %293 = vmatmul.f32.gmra.mxu0 %v230
  %v294 = vpop.f32.mrf.mxu0
  %v295 = vadd.f32 %v188, %v294
  %296 = vmatmul.f32.gmra.mxu0 %v233
  %v297 = vpop.f32.mrf.mxu0
  %v298 = vadd.f32 %v188, %v297
  %299 = vmatmul.f32.gmra.mxu0 %v236
  %v300 = vpop.f32.mrf.mxu0
  %v301 = vadd.f32 %v188, %v300
  %302 = vdwg.mxu0
  %v303 = vmax.f32 %v256, 0.0
  %v304 = vmax.f32 %v259, 0.0
  %v305 = vmax.f32 %v262, 0.0
  %v306 = vmax.f32 %v265, 0.0
  %v307 = vmax.f32 %v268, 0.0
  %v308 = vmax.f32 %v271, 0.0
  %v309 = vmax.f32 %v274, 0.0
  %v310 = vmax.f32 %v277, 0.0
  %v311 = vmax.f32 %v280, 0.0
  %v312 = vmax.f32 %v283, 0.0
  %v313 = vmax.f32 %v286, 0.0
  %v314 = vmax.f32 %v289, 0.0
  %v315 = vmax.f32 %v292, 0.0
  %v316 = vmax.f32 %v295, 0.0
  %v317 = vmax.f32 %v298, 0.0
  %v318 = vmax.f32 %v301, 0.0
  %v319 = vld [vmem:[%s5] sm:$0x1]
  %v320 = vld [vmem:[#allocation2] sm:$0x1]
  %322 = vset.pattern.permute.xlu0 0
  %323 = vperm.xlu0 %322, %v320
  %v324 = vpop.permute.xlu0 %323
  %v326 = vperm.slane %v324, 0
  %v328 = vsel %vm52, %v319, 0
  %v331 = vsel %vm52, %v303, 0
  %v334 = vsel %vm52, %v304, 0
  %v337 = vsel %vm52, %v305, 0
  %v340 = vsel %vm52, %v306, 0
  %v343 = vsel %vm52, %v307, 0
  %v346 = vsel %vm52, %v308, 0
  %v349 = vsel %vm52, %v309, 0
  %v352 = vsel %vm52, %v310, 0
  %v355 = vsel %vm52, %v311, 0
  %v358 = vsel %vm52, %v312, 0
  %v361 = vsel %vm52, %v313, 0
  %v364 = vsel %vm52, %v314, 0
  %v367 = vsel %vm52, %v315, 0
  %v370 = vsel %vm52, %v316, 0
  %v373 = vsel %vm52, %v317, 0
  %v376 = vsel %vm52, %v318, 0
  %378 = vmatpush.xpose.msra.mxu0 %v376
  %379 = vmatpush.xpose.msra.mxu0 %v373
  %380 = vmatpush.xpose.msra.mxu0 %v370
  %381 = vmatpush.xpose.msra.mxu0 %v367
  %382 = vmatpush.xpose.msra.mxu0 %v364
  %383 = vmatpush.xpose.msra.mxu0 %v361
  %384 = vmatpush.xpose.msra.mxu0 %v358
  %385 = vmatpush.xpose.msra.mxu0 %v355
  %386 = vmatpush.xpose.msra.mxu0 %v352
  %387 = vmatpush.xpose.msra.mxu0 %v349
  %388 = vmatpush.xpose.msra.mxu0 %v346
  %389 = vmatpush.xpose.msra.mxu0 %v343
  %390 = vmatpush.xpose.msra.mxu0 %v340
  %391 = vmatpush.xpose.msra.mxu0 %v337
  %392 = vmatpush.xpose.msra.mxu0 %v334
  %393 = vmatpush.xpose.msra.mxu0 %v331
  %394 = vmatmul.f32.gmra.mxu0 %v328
  %v395 = vpop.f32.mrf.mxu0
  %v396 = vadd.f32 %v326, %v395
  %397 = vdwg.mxu0
  %398 = vst [vmem:[%s7] sm:$0x1] %v396
  // Predicated region
  $region30: #{critic_forward.1} parent=0 // pred_check
    _
  $region31: #{critic_forward.1} parent=0 // pred_check_branch
    %400 = sbr.rel (0) target = $region33
  $region32: #{critic_forward.1} parent=0 // pred_region
    _
  $region33: #{critic_forward.1} parent=0 // pred_fallthru
    _
  // Predicated region
  $region34: #{critic_forward.1} parent=0 // pred_check
    _
  $region35: #{critic_forward.1} parent=0 // pred_check_branch
    %402 = sbr.rel (0) target = $region37
  $region36: #{critic_forward.1} parent=0 // pred_region
    _
  $region37: #{critic_forward.1} parent=0 // pred_fallthru
    _

</llo_original>
